<compile_context>
chip_gen: v5e
topology: v5e:2x2
jax: 0.10.0
libtpu: 0.0.40
codegen_flags: <defaults>
</compile_context>

<pallas_src>
import jax
import jax.numpy as jnp
from jax.experimental import pallas as pl
from jax.experimental.pallas import tpu as pltpu


def _cdiv(a, b):
    return (a + b - 1) // b


def _round_up(a, m):
    return _cdiv(a, m) * m


def _make_integral_kernel(R, chunk):
    n_full = R // chunk
    rem = R - n_full * chunk

    def integral_kernel(hm_ref, idx_ref, coord_ref):
        # hm_ref   : (block_rows, R)  heatmap logits (native dtype, bf16 ok)
        # idx_ref  : (1, R)           spatial index constant [0..R-1] (f32)
        # coord_ref: (block_rows, 1)  normalized soft-argmax coordinate in [0, 1)
        rows = hm_ref.shape[0]

        # Row max in native dtype (max is exact in any float dtype), f32 after.
        m = jnp.max(hm_ref[...], axis=-1, keepdims=True).astype(jnp.float32)

        num = jnp.zeros((rows, 1), jnp.float32)
        den = jnp.zeros((rows, 1), jnp.float32)

        def accum(start, width, num, den):
            xc = hm_ref[:, start:start + width].astype(jnp.float32)
            e = jnp.exp(xc - m)                              # (rows, width) f32
            idx = idx_ref[:, start:start + width]            # (1, width), broadcasts
            den = den + jnp.sum(e, axis=-1, keepdims=True)
            num = num + jnp.sum(e * idx, axis=-1, keepdims=True)
            return num, den

        # Static unroll over lane chunks: only (rows, chunk) f32 temps are live,
        # instead of three full-tile f32 temporaries.
        for c in range(n_full):
            num, den = accum(c * chunk, chunk, num, den)
        if rem:
            num, den = accum(n_full * chunk, rem, num, den)

        inv = pl.reciprocal(den * jnp.float32(R), approx=False)
        coord_ref[...] = num * inv

    return integral_kernel


def heatmap_integral_joint(out_nchw, joint_bounds, norm_type="softmax"):
    """out_nchw: (B, dof, H, W) float; joint_bounds: (dof, 2) float. Returns (B, dof) f32."""
    assert norm_type == "softmax"
    B, dof, H, W = out_nchw.shape
    R = H * W
    rows = B * dof

    # Keep native dtype over the DMA (bf16 halves HBM traffic); cast in-kernel.
    hm = out_nchw.reshape(rows, R)
    itemsize = jnp.dtype(hm.dtype).itemsize

    # ---- lane-chunk size for the in-kernel reduction (<= 16 unrolled chunks) ----
    if R <= 2048:
        chunk = R
    else:
        chunk = min(R, max(1024, _round_up(_cdiv(R, 16), 128)))

    # ---- per-generation VMEM limit: 75% of physical, capped at 96 MiB ----
    # (v5e/v6e: 128 MiB -> 96 MiB limit; v7x: 64 MiB -> 48 MiB limit)
    try:
        phys_vmem = int(getattr(pltpu.get_tpu_info(), "vmem_capacity_bytes",
                                64 * 1024 * 1024))
    except Exception:
        phys_vmem = 64 * 1024 * 1024  # conservative (v7x-sized) fallback
    vmem_limit = min(phys_vmem * 3 // 4, 96 * 1024 * 1024)
    tile_budget = vmem_limit * 3 // 4  # headroom for output bufs / compiler scratch

    # Honest per-row footprint:
    #   2x double-buffered native-dtype input row
    # + f32 chunk temporaries (xc, e, e*idx)
    # + 128-lane-padded, double-buffered (block_rows, 1) f32 output row.
    per_row_bytes = 2 * R * itemsize + 3 * chunk * 4 + 2 * 128 * 4
    fixed_bytes = 2 * 8 * R * 4  # (1, R) f32 index row, sublane-padded, 2 bufs
    max_rows_by_vmem = max(8, (tile_budget - fixed_bytes) // per_row_bytes)

    # ---- balanced block planning ----
    rows_rounded = _round_up(rows, 8)
    cap_rows = max(8, (max_rows_by_vmem // 8) * 8)

    def blocks_for(n):
        br = _round_up(max(1, _cdiv(rows_rounded, n)), 8)
        return _cdiv(rows_rounded, br), br

    n_target = _cdiv(rows_rounded, cap_rows)
    if n_target == 1 and rows_rounded >= 16:
        n_target = 2  # let both v7x TensorCores work on the "parallel" axis
    if n_target > 1 and n_target % 2 == 1:
        nb_even, _ = blocks_for(n_target + 1)
        if nb_even == n_target + 1:  # even split without creating an all-padding block
            n_target = n_target + 1
    n_blocks, block_rows = blocks_for(n_target)
    rows_padded = n_blocks * block_rows

    if rows_padded != rows:
        # padded rows produce harmless softmax values; dropped below
        hm = jnp.pad(hm, ((0, rows_padded - rows), (0, 0)))

    # Hoisted spatial-index constant (loaded once; constant index_map).
    idx = jnp.arange(R, dtype=jnp.float32).reshape(1, R)

    cost = pl.CostEstimate(
        flops=5 * rows_padded * R,
        transcendentals=rows_padded * R,
        bytes_accessed=rows_padded * R * itemsize + R * 4 + rows_padded * 4,
    )

    coord = pl.pallas_call(
        _make_integral_kernel(R, chunk),
        out_shape=jax.ShapeDtypeStruct((rows_padded, 1), jnp.float32),
        grid_spec=pltpu.PrefetchScalarGridSpec(
            num_scalar_prefetch=0,
            grid=(n_blocks,),
            in_specs=[
                # NOTE: add pipeline_mode=pl.Buffered(3) here only if profiling
                # shows exposed DMA at block boundaries (budget assumes 2 bufs).
                pl.BlockSpec((block_rows, R), lambda i: (i, 0)),
                pl.BlockSpec((1, R), lambda i: (0, 0)),  # constant, not re-fetched
            ],
            out_specs=pl.BlockSpec((block_rows, 1), lambda i: (i, 0)),
        ),
        compiler_params=pltpu.CompilerParams(
            dimension_semantics=("parallel",),
            vmem_limit_bytes=int(vmem_limit),
        ),
        cost_estimate=cost,
    )(hm, idx)

    coord = coord[:rows].reshape(B, dof)

    # Per-joint affine mapping done in the wrapper (O(B*dof) scalars; fuses in XLA).
    lower = joint_bounds[:, 0].astype(jnp.float32)[None, :]                        # (1, dof)
    jrange = (joint_bounds[:, 1] - joint_bounds[:, 0]).astype(jnp.float32)[None, :]
    return coord * jrange + lower


def _reference_jax(out_nchw, joint_bounds):
    """Pure-JAX mirror of the PyTorch forward, for correctness checking."""
    B, dof, H, W = out_nchw.shape
    R = H * W
    hm = out_nchw.reshape(B, dof, R).astype(jnp.float32)
    hm = jax.nn.softmax(hm, axis=2)
    hm = hm / jnp.sum(hm, axis=2, keepdims=True)
    rng = jnp.arange(R, dtype=jnp.float32).reshape(1, 1, R)
    coord = jnp.sum(hm * rng, axis=2, keepdims=True) / float(R)
    bounds = joint_bounds.reshape(1, dof, 2).astype(jnp.float32)
    jr = bounds[:, :, 1:2] - bounds[:, :, 0:1]
    joints = coord * jr + bounds[:, :, 0:1]
    return joints.squeeze(-1)


if __name__ == "__main__":
    key = jax.random.PRNGKey(0)
    B, dof, H, W = 2, 4, 16, 16

    # synthetic backbone heatmap output and deterministic joint bounds
    x = jax.random.normal(key, (B, dof, H, W), dtype=jnp.float32) * 2.0
    lows = -1.5 - 0.25 * jnp.arange(dof, dtype=jnp.float32)
    highs = 1.5 + 0.1 * jnp.arange(dof, dtype=jnp.float32)
    joint_bounds = jnp.stack([lows, highs], axis=1)  # (dof, 2)

    joints = heatmap_integral_joint(x, joint_bounds)
    joints = jax.block_until_ready(joints)

    ref = _reference_jax(x, joint_bounds)
    assert joints.shape == (B, dof), joints.shape
    assert jnp.allclose(joints, ref, atol=1e-5, rtol=1e-5), (joints, ref)

    print("KERNEL_OK")
</pallas_src>

<mosaic_0001>
module attributes {stable_mosaic.version = 11 : i64} {
  func.func @integral_kernel(%arg0: i32, %arg1: memref<8x256xf32, #tpu.memory_space<vmem>>, %arg2: memref<1x256xf32, #tpu.memory_space<vmem>>, %arg3: memref<8x1xf32, #tpu.memory_space<vmem>>) attributes {dimension_semantics = [#tpu.dimension_semantics<parallel>], iteration_bounds = array<i64: 1>, scalar_prefetch = 0 : i64, scratch_operands = 0 : i64, tpu.core_type = #tpu.core_type<tc>, window_params = [{transform_indices = @transform_0, window_bounds = array<i64: 8, 256>}, {pipeline_mode = #tpu.pipeline_mode<synchronous>, transform_indices = @transform_1, window_bounds = array<i64: 1, 256>}, {transform_indices = @transform_2, window_bounds = array<i64: 8, 1>}]} {
    %c0 = arith.constant 0 : index
    %c0_0 = arith.constant 0 : index
    %0 = vector.load %arg1[%c0, %c0_0] : memref<8x256xf32, #tpu.memory_space<vmem>>, vector<8x256xf32>
    %cst = arith.constant dense<0xFF800000> : vector<8xf32>
    %1 = vector.multi_reduction <maximumf>, %0, %cst [1] : vector<8x256xf32> to vector<8xf32>
    %2 = vector.shape_cast %1 : vector<8xf32> to vector<8x1xf32>
    %cst_1 = arith.constant 0.000000e+00 : f32
    %3 = vector.broadcast %cst_1 : f32 to vector<8x1xf32>
    %cst_2 = arith.constant 0.000000e+00 : f32
    %4 = vector.broadcast %cst_2 : f32 to vector<8x1xf32>
    %c0_3 = arith.constant 0 : index
    %c0_4 = arith.constant 0 : index
    %5 = vector.load %arg1[%c0_3, %c0_4] : memref<8x256xf32, #tpu.memory_space<vmem>>, vector<8x256xf32>
    %6 = vector.broadcast %2 : vector<8x1xf32> to vector<8x256xf32>
    %7 = arith.subf %5, %6 : vector<8x256xf32>
    %8 = math.exp %7 : vector<8x256xf32>
    %c0_5 = arith.constant 0 : index
    %c0_6 = arith.constant 0 : index
    %9 = vector.load %arg2[%c0_5, %c0_6] : memref<1x256xf32, #tpu.memory_space<vmem>>, vector<1x256xf32>
    %cst_7 = arith.constant dense<0.000000e+00> : vector<8xf32>
    %10 = vector.multi_reduction <add>, %8, %cst_7 [1] : vector<8x256xf32> to vector<8xf32>
    %11 = vector.shape_cast %10 : vector<8xf32> to vector<8x1xf32>
    %12 = arith.addf %4, %11 : vector<8x1xf32>
    %13 = vector.broadcast %9 : vector<1x256xf32> to vector<8x256xf32>
    %14 = arith.mulf %8, %13 : vector<8x256xf32>
    %cst_8 = arith.constant dense<0.000000e+00> : vector<8xf32>
    %15 = vector.multi_reduction <add>, %14, %cst_8 [1] : vector<8x256xf32> to vector<8xf32>
    %16 = vector.shape_cast %15 : vector<8xf32> to vector<8x1xf32>
    %17 = arith.addf %3, %16 : vector<8x1xf32>
    %cst_9 = arith.constant 2.560000e+02 : f32
    %18 = vector.broadcast %cst_9 : f32 to vector<8x1xf32>
    %19 = arith.mulf %12, %18 : vector<8x1xf32>
    %20 = tpu.reciprocal %19 : vector<8x1xf32> -> vector<8x1xf32>
    %21 = arith.mulf %17, %20 : vector<8x1xf32>
    %c0_10 = arith.constant 0 : index
    %c0_11 = arith.constant 0 : index
    %22 = vector.load %arg3[%c0_10, %c0_11] : memref<8x1xf32, #tpu.memory_space<vmem>>, vector<8x1xf32>
    tpu.vector_store %arg3[%c0_10, %c0_11], %21 {strides = array<i32>} : memref<8x1xf32, #tpu.memory_space<vmem>>, vector<8x1xf32>,
    return
  }
  func.func @transform_0(%arg0: i32) -> (i32, i32) {
    %c0_i32 = arith.constant 0 : i32
    %c0_i32_0 = arith.constant 0 : i32
    return %arg0, %c0_i32 : i32, i32
  }
  func.func @transform_1(%arg0: i32) -> (i32, i32) {
    %c0_i32 = arith.constant 0 : i32
    %c0_i32_0 = arith.constant 0 : i32
    %c0_i32_1 = arith.constant 0 : i32
    return %c0_i32, %c0_i32_0 : i32, i32
  }
  func.func @transform_2(%arg0: i32) -> (i32, i32) {
    %c0_i32 = arith.constant 0 : i32
    %c0_i32_0 = arith.constant 0 : i32
    return %arg0, %c0_i32 : i32, i32
  }
}

</mosaic_0001>

<llo_original>
// kernel: tpu_custom_call.1
$region0: #{tpu_custom_call.1}
  #allocation0 [shape = 'u32[]', space=smem, size = 0x4, offset = 0x4, fixed_abs, tag = 'smem constant byte address 0x4 - core index']
  #allocation1 [shape = 'u32[72,128]{1,0:T(1,128)}', space=vmem, size = 0x9000, scoped, tag = 'internal scratch']
  %s0 = inlined_call_operand.hbm [shape: f32[8,256], index: 0, kind: input, shape index: {}]
  %s1 = inlined_call_operand.hbm [shape: f32[1,256], index: 1, kind: input, shape index: {}]
  %s2 = inlined_call_operand.vmem [shape: f32[8,1], index: 2, kind: output, shape index: {}]
  %s3 = sld [smem:[#allocation0]]
  $region26: #{tpu_custom_call.1} parent=0
    _
  %s5 = ssub.s32 1, %s3
  %s6 = scalar_select 0, %s5, %s3
  $region1: #{tpu_custom_call.1} parent=0
    #allocation2 [shape = 'u8[8192]{0}', space=vmem, size = 0x2000, scoped, tag = 'input window, operand 0, single buffered']
    #allocation3 [shape = 's32[1]{0}', space=sflag, size = 0x4, scoped, tag = 'scoped memory for tpu_custom_call.1']
    #allocation4 [shape = 'u8[1024]{0}', space=vmem, size = 0x400, scoped, tag = 'input window, operand 1, single buffered']
    #allocation5 [shape = 's32[1]{0}', space=sflag, size = 0x4, scoped, tag = 'scoped memory for tpu_custom_call.1']
    %7 = vsyncpa [#allocation3], 0
    %8 = vsyncpa [#allocation5], 0
    // Predicated region
    $region2: #{tpu_custom_call.1} parent=1 // pred_check
      _
    $region3: #{tpu_custom_call.1} parent=1 // pred_check_branch
      %10 = sbr.rel (0) target = $region5
    $region4: #{tpu_custom_call.1} parent=1 // pred_region
      %12 = vsyncadd [#allocation3], 0
      %s14 = sshll.u32 %s0, 4
      %s15 = int_to_ptr.hbm [resolvable:$true] %s14
      %s16 = sshll.u32 [#allocation2], 4
      %s17 = int_to_ptr.vmem [resolvable:$true] %s16
      %19 = dma.hbm_to_vmem [thread:$0]  %s15, 256, %s17, [#allocation3]
    $region5: #{tpu_custom_call.1} parent=1 // pred_fallthru
      _
    // Predicated region
    $region6: #{tpu_custom_call.1} parent=1 // pred_check
      _
    $region7: #{tpu_custom_call.1} parent=1 // pred_check_branch
      %21 = sbr.rel (0) target = $region9
    $region8: #{tpu_custom_call.1} parent=1 // pred_region
      %23 = vsyncadd [#allocation5], 0
      %s25 = sshll.u32 %s1, 4
      %s26 = int_to_ptr.hbm [resolvable:$true] %s25
      %s27 = sshll.u32 [#allocation4], 4
      %s28 = int_to_ptr.vmem [resolvable:$true] %s27
      %30 = dma.hbm_to_vmem [thread:$0]  %s26, 32, %s28, [#allocation5]
    $region9: #{tpu_custom_call.1} parent=1 // pred_fallthru
      _
    // Predicated region
    $region10: #{tpu_custom_call.1} parent=1 // pred_check
      _
    $region11: #{tpu_custom_call.1} parent=1 // pred_check_branch
      %32 = sbr.rel (0) target = $region13
    $region12: #{tpu_custom_call.1} parent=1 // pred_region
      %34 = dma.done [#allocation3], 256
    $region13: #{tpu_custom_call.1} parent=1 // pred_fallthru
      _
    // Predicated region
    $region14: #{tpu_custom_call.1} parent=1 // pred_check
      _
    $region15: #{tpu_custom_call.1} parent=1 // pred_check_branch
      %36 = sbr.rel (0) target = $region17
    $region16: #{tpu_custom_call.1} parent=1 // pred_region
      %38 = dma.done [#allocation5], 32
    $region17: #{tpu_custom_call.1} parent=1 // pred_fallthru
      _
    %v39 = vld [vmem:[#allocation2] sm:$0xff]
    %v40 = vld [vmem:[#allocation2 + $0x8] sm:$0xff]
    %v41 = vmax.f32 %v39, %v40
    %42 = vmax.xlane.f32.xlu0 %v41
    %v43 = vpop.xlane.xlu0 %42
    %v44 = vsub.f32 %v39, %v43
    %v45 = vsub.f32 %v40, %v43
    %v46 = vmul.f32 %v44, 1.442695
    %v47 = vpow.pop %v46
    %v48 = vmul.f32 %v45, 1.442695
    %v49 = vpow.pop %v48
    %v50 = vld [vmem:[#allocation4] sm:$0x3]
    %v51 = vadd.f32 %v47, %v49
    %52 = vadd.xlane.f32.xlu0 %v51
    %v53 = vpop.xlane.xlu0 %52
    %v54 = vadd.f32 %v53, 0.0
    %v56 = vperm.slane %v50, 0
    %v57 = vperm.slane %v50, 1
    %v60 = vmul.f32 %v47, %v56
    %v61 = vmul.f32 %v49, %v57
    %v62 = vadd.f32 %v60, %v61
    %63 = vadd.xlane.f32.xlu0 %v62
    %v64 = vpop.xlane.xlu0 %63
    %v65 = vadd.f32 %v64, 0.0
    %v66 = vmul.f32 %v54, 256.0
    %v67 = vrcp.pop %v66
    %v68 = vmul.f32 %v66, %v67
    %v69 = vsub.f32 1.0, %v68
    %v70 = vmul.f32 %v67, %v69
    %v71 = vadd.f32 %v67, %v70
    %vm72 = vweird.f32 %v66
    %vm73 = vweird.f32 %v67
    %vm74 = vmor %vm72, %vm73
    %v75 = vsel %vm74, %v67, %v71
    %v76 = vand.u32 2147483647, %v66
    %vm77 = vcmp.eq.f32.partialorder %v76, 8.507059e+37
    %v78 = vand.u32 %v66, 2147483648
    %v79 = vor.u32 1.1754944e-38, %v78
    %v80 = vsel %vm77, %v79, %v75
    %v81 = vmul.f32 %v65, %v80
    %vm82 = vcmask 7168
    %83 = vst.msk [vmem:[%s2] sm:$0xff] %vm82, %v81
    // Predicated region
    $region18: #{tpu_custom_call.1} parent=1 // pred_check
      _
    $region19: #{tpu_custom_call.1} parent=1 // pred_check_branch
      %85 = sbr.rel (0) target = $region21
    $region20: #{tpu_custom_call.1} parent=1 // pred_region
      _
    $region21: #{tpu_custom_call.1} parent=1 // pred_fallthru
      _
    // Predicated region
    $region22: #{tpu_custom_call.1} parent=1 // pred_check
      _
    $region23: #{tpu_custom_call.1} parent=1 // pred_check_branch
      %87 = sbr.rel (0) target = $region25
    $region24: #{tpu_custom_call.1} parent=1 // pred_region
      _
    $region25: #{tpu_custom_call.1} parent=1 // pred_fallthru
      _
    %88 = vsyncpa [#allocation3], 1
    %89 = vsyncpa [#allocation5], 1

</llo_original>
